<compile_context>
chip_gen: v6e
topology: v6e:2x2x1
jax: 0.10.0
libtpu: 0.0.40
codegen_flags: <defaults>
</compile_context>

<pallas_src>
import functools

import jax
import jax.numpy as jnp
from jax.experimental import pallas as pl
from jax.experimental.pallas import tpu as pltpu


def _round_up(x: int, m: int) -> int:
    return (x + m - 1) // m * m


# ---------------------------------------------------------------------------
# Parameter packing (one-time, outside the per-step call path).
# ---------------------------------------------------------------------------
def pack_gru_params(params, d_in, d_h, matmul_dtype=jnp.float32):
    """Repack PyTorch-layout GRU params into the fused, lane-dense layout.

    Layout:
      w_x    : (din_pad, 3*dh_pad)  x-part of [Wr | Wz | Wh], bias folded into
                                    row d_in (the LHS carries a 1.0 there).
      w_rz_h : (dh_pad, 2*dh_pad)   h-part of [Wr | Wz].
      wh_h   : (dh_pad, dh_pad)     h-part of Wh (applied to r*h in-kernel).
    """
    din_pad = _round_up(d_in + 1, 128)   # +1 lane reserved for the bias "1"
    dh_pad = _round_up(d_h, 128)

    wr_t = jnp.asarray(params["Wr"], jnp.float32).T   # (d_in + d_h, d_h)
    wz_t = jnp.asarray(params["Wz"], jnp.float32).T
    wh_t = jnp.asarray(params["Wh"], jnp.float32).T
    br = jnp.asarray(params["br"], jnp.float32)
    bz = jnp.asarray(params["bz"], jnp.float32)
    bh = jnp.asarray(params["bh"], jnp.float32)

    w_x = jnp.zeros((din_pad, 3 * dh_pad), jnp.float32)
    w_x = w_x.at[:d_in, 0 * dh_pad:0 * dh_pad + d_h].set(wr_t[:d_in])
    w_x = w_x.at[:d_in, 1 * dh_pad:1 * dh_pad + d_h].set(wz_t[:d_in])
    w_x = w_x.at[:d_in, 2 * dh_pad:2 * dh_pad + d_h].set(wh_t[:d_in])
    # Folded biases live in row d_in (paired with the constant-1 lane of x).
    w_x = w_x.at[d_in, 0 * dh_pad:0 * dh_pad + d_h].set(br)
    w_x = w_x.at[d_in, 1 * dh_pad:1 * dh_pad + d_h].set(bz)
    w_x = w_x.at[d_in, 2 * dh_pad:2 * dh_pad + d_h].set(bh)

    w_rz_h = jnp.zeros((dh_pad, 2 * dh_pad), jnp.float32)
    w_rz_h = w_rz_h.at[:d_h, 0 * dh_pad:0 * dh_pad + d_h].set(wr_t[d_in:])
    w_rz_h = w_rz_h.at[:d_h, 1 * dh_pad:1 * dh_pad + d_h].set(wz_t[d_in:])

    wh_h = jnp.zeros((dh_pad, dh_pad), jnp.float32)
    wh_h = wh_h.at[:d_h, :d_h].set(wh_t[d_in:])

    return {
        "w_x": w_x.astype(matmul_dtype),
        "w_rz_h": w_rz_h.astype(matmul_dtype),
        "wh_h": wh_h.astype(matmul_dtype),
        "d_in": d_in, "d_h": d_h, "din_pad": din_pad, "dh_pad": dh_pad,
    }


# ---------------------------------------------------------------------------
# Shared in-kernel GRU math (one step on lane-padded tiles).
# ---------------------------------------------------------------------------
def _gru_step(x_pad, h, w_x, w_rz_h, wh_h, dh_pad):
    """x_pad: (tb, din_pad) mm-dtype (bias lane included); h: (tb, dh_pad) f32."""
    mm = w_x.dtype
    gx = jnp.dot(x_pad, w_x, preferred_element_type=jnp.float32)        # (tb, 3*dh_pad)
    gh = jnp.dot(h.astype(mm), w_rz_h, preferred_element_type=jnp.float32)  # (tb, 2*dh_pad)

    # Consume r first (-> rh -> candidate matmul) to keep fewer slices live.
    r = jax.nn.sigmoid(gx[:, 0 * dh_pad:1 * dh_pad] + gh[:, 0 * dh_pad:1 * dh_pad])
    rh = (r * h).astype(mm)
    h_tilde = jnp.tanh(gx[:, 2 * dh_pad:3 * dh_pad]
                       + jnp.dot(rh, wh_h, preferred_element_type=jnp.float32))
    z = jax.nn.sigmoid(gx[:, 1 * dh_pad:2 * dh_pad] + gh[:, 1 * dh_pad:2 * dh_pad])
    # (1 - z) * h + z * h_tilde  ==  h + z * (h_tilde - h)
    return h + z * (h_tilde - h)


# ---------------------------------------------------------------------------
# Single-step kernel: grid over batch rows, weights VMEM-resident.
# ---------------------------------------------------------------------------
def gru_cell_kernel(x_ref, h_ref, w_x_ref, w_rz_h_ref, wh_h_ref, out_ref, *, dh_pad):
    h_next = _gru_step(x_ref[...], h_ref[...],
                       w_x_ref[...], w_rz_h_ref[...], wh_h_ref[...], dh_pad)
    out_ref[...] = h_next.astype(out_ref.dtype)


@functools.partial(jax.jit,
                   static_argnames=("d_in", "d_h", "din_pad", "dh_pad", "block_b"))
def _gru_cell_call(x, h, w_x, w_rz_h, wh_h, *,
                   d_in, d_h, din_pad, dh_pad, block_b):
    b = x.shape[0]
    mm = w_x.dtype

    tb = _round_up(min(block_b, b), 8)         # row tile (sublane-aligned)
    b_pad = _round_up(b, tb)

    x_pad = jnp.zeros((b_pad, din_pad), mm)
    x_pad = x_pad.at[:b, :d_in].set(x.astype(mm))
    x_pad = x_pad.at[:b, d_in].set(jnp.ones((b,), mm))       # folded-bias lane
    h_pad = jnp.zeros((b_pad, dh_pad), jnp.float32).at[:b, :d_h].set(
        h.astype(jnp.float32))

    row = lambda shape: pl.BlockSpec(shape, lambda i: (i, 0))
    const = lambda shape: pl.BlockSpec(shape, lambda i: (0, 0))   # resident

    out = pl.pallas_call(
        functools.partial(gru_cell_kernel, dh_pad=dh_pad),
        out_shape=jax.ShapeDtypeStruct((b_pad, dh_pad), jnp.float32),
        grid=(b_pad // tb,),
        in_specs=[
            row((tb, din_pad)),
            row((tb, dh_pad)),
            const((din_pad, 3 * dh_pad)),
            const((dh_pad, 2 * dh_pad)),
            const((dh_pad, dh_pad)),
        ],
        out_specs=row((tb, dh_pad)),
        compiler_params=pltpu.CompilerParams(
            dimension_semantics=("parallel",)),     # megacore-shardable on v7x
    )(x_pad, h_pad, w_x, w_rz_h, wh_h)

    # TODO(synk): recurrent callers should keep the padded (b_pad, dh_pad) slab
    # between steps (or use gru_sequence_pallas) instead of re-slicing here.
    return out[:b, :d_h].astype(h.dtype)


def gru_cell_pallas(x, h, packed, block_b=256):
    return _gru_cell_call(
        x, h, packed["w_x"], packed["w_rz_h"], packed["wh_h"],
        d_in=packed["d_in"], d_h=packed["d_h"],
        din_pad=packed["din_pad"], dh_pad=packed["dh_pad"], block_b=block_b)


# ---------------------------------------------------------------------------
# Fused time-loop kernel: grid=(T,) "arbitrary", h carried in VMEM scratch,
# weights loaded once (constant block index -> no re-DMA between steps).
# ---------------------------------------------------------------------------
def gru_sequence_kernel(x_ref, h0_ref, w_x_ref, w_rz_h_ref, wh_h_ref,
                        out_ref, h_scratch, *, dh_pad):
    @pl.when(pl.program_id(0) == 0)
    def _():
        h_scratch[...] = h0_ref[...]

    h_next = _gru_step(x_ref[0], h_scratch[...],
                       w_x_ref[...], w_rz_h_ref[...], wh_h_ref[...], dh_pad)
    h_scratch[...] = h_next
    out_ref[0] = h_next.astype(out_ref.dtype)


@functools.partial(jax.jit, static_argnames=("d_in", "d_h", "din_pad", "dh_pad"))
def _gru_sequence_call(xs, h0, w_x, w_rz_h, wh_h, *, d_in, d_h, din_pad, dh_pad):
    t, b = xs.shape[0], xs.shape[1]
    mm = w_x.dtype
    b_pad = _round_up(b, 8)

    xs_pad = jnp.zeros((t, b_pad, din_pad), mm)
    xs_pad = xs_pad.at[:, :b, :d_in].set(xs.astype(mm))
    xs_pad = xs_pad.at[:, :b, d_in].set(jnp.ones((t, b), mm))   # folded-bias lane
    h0_pad = jnp.zeros((b_pad, dh_pad), jnp.float32).at[:b, :d_h].set(
        h0.astype(jnp.float32))

    const = lambda shape: pl.BlockSpec(shape, lambda i: (0,) * len(shape))

    out = pl.pallas_call(
        functools.partial(gru_sequence_kernel, dh_pad=dh_pad),
        out_shape=jax.ShapeDtypeStruct((t, b_pad, dh_pad), jnp.float32),
        grid=(t,),
        in_specs=[
            pl.BlockSpec((1, b_pad, din_pad), lambda i: (i, 0, 0)),
            const((b_pad, dh_pad)),
            const((din_pad, 3 * dh_pad)),
            const((dh_pad, 2 * dh_pad)),
            const((dh_pad, dh_pad)),
        ],
        out_specs=pl.BlockSpec((1, b_pad, dh_pad), lambda i: (i, 0, 0)),
        scratch_shapes=[pltpu.VMEM((b_pad, dh_pad), jnp.float32)],
        compiler_params=pltpu.CompilerParams(
            dimension_semantics=("arbitrary",)),    # carried recurrence
    )(xs_pad, h0_pad, w_x, w_rz_h, wh_h)

    return out[:, :b, :d_h].astype(h0.dtype)


def gru_sequence_pallas(xs, h0, packed):
    """Applies the GRU cell over xs[t] for t=0..T-1; returns all hidden states."""
    return _gru_sequence_call(
        xs, h0, packed["w_x"], packed["w_rz_h"], packed["wh_h"],
        d_in=packed["d_in"], d_h=packed["d_h"],
        din_pad=packed["din_pad"], dh_pad=packed["dh_pad"])


# ---------------------------------------------------------------------------
# Pure-JAX reference (mirrors the PyTorch module).
# ---------------------------------------------------------------------------
def gru_cell_ref(x, h, params):
    combined = jnp.concatenate([x, h], axis=-1)
    r = jax.nn.sigmoid(combined @ params["Wr"].T + params["br"])
    z = jax.nn.sigmoid(combined @ params["Wz"].T + params["bz"])
    combined2 = jnp.concatenate([x, r * h], axis=-1)
    h_tilde = jnp.tanh(combined2 @ params["Wh"].T + params["bh"])
    return (1.0 - z) * h + z * h_tilde


if __name__ == "__main__":
    key = jax.random.PRNGKey(0)
    B, D_in, D_h, T = 8, 16, 32, 8

    keys = jax.random.split(key, 10)
    fan_in = D_in + D_h
    bound = 1.0 / jnp.sqrt(jnp.float32(fan_in))
    params = {
        "Wr": jax.random.uniform(keys[0], (D_h, fan_in), jnp.float32, -bound, bound),
        "br": jax.random.uniform(keys[1], (D_h,), jnp.float32, -bound, bound),
        "Wz": jax.random.uniform(keys[2], (D_h, fan_in), jnp.float32, -bound, bound),
        "bz": jax.random.uniform(keys[3], (D_h,), jnp.float32, -bound, bound),
        "Wh": jax.random.uniform(keys[4], (D_h, fan_in), jnp.float32, -bound, bound),
        "bh": jax.random.uniform(keys[5], (D_h,), jnp.float32, -bound, bound),
    }
    x = jax.random.normal(keys[6], (B, D_in), jnp.float32)
    h = jax.random.normal(keys[7], (B, D_h), jnp.float32)

    h_ref = gru_cell_ref(x, h, params)

    # --- single step, f32 matmul path (exact) -----------------------------
    packed_f32 = pack_gru_params(params, D_in, D_h, matmul_dtype=jnp.float32)
    h_next = gru_cell_pallas(x, h, packed_f32)
    jax.block_until_ready(h_next)
    assert h_next.shape == (B, D_h)
    assert jnp.allclose(h_next, h_ref, atol=1e-5, rtol=1e-5), "f32 mismatch"

    # --- single step, bf16 matmul operands (f32 accumulate / gate math) ----
    packed_bf16 = pack_gru_params(params, D_in, D_h, matmul_dtype=jnp.bfloat16)
    h_next_bf16 = gru_cell_pallas(x, h, packed_bf16)
    jax.block_until_ready(h_next_bf16)
    assert jnp.allclose(h_next_bf16, h_ref, atol=5e-2, rtol=5e-2), "bf16 mismatch"

    # --- multi-tile batch grid (exercises row tiling + padding) ------------
    B2 = 40
    x2 = jax.random.normal(keys[8], (B2, D_in), jnp.float32)
    h2 = jax.random.normal(keys[9], (B2, D_h), jnp.float32)
    h2_next = gru_cell_pallas(x2, h2, packed_f32, block_b=16)   # grid of 3 tiles
    jax.block_until_ready(h2_next)
    assert jnp.allclose(h2_next, gru_cell_ref(x2, h2, params),
                        atol=1e-5, rtol=1e-5), "tiled-batch mismatch"

    # --- fused time loop: grid=(T,), weights resident, h in VMEM scratch ---
    xs = jax.random.normal(jax.random.PRNGKey(1), (T, B, D_in), jnp.float32)
    hs_ref = []
    hc = h
    for t in range(T):
        hc = gru_cell_ref(xs[t], hc, params)
        hs_ref.append(hc)
    hs_ref = jnp.stack(hs_ref)

    hs = gru_sequence_pallas(xs, h, packed_f32)
    jax.block_until_ready(hs)
    assert hs.shape == (T, B, D_h)
    assert jnp.allclose(hs, hs_ref, atol=1e-4, rtol=1e-4), "sequence mismatch"

    print("KERNEL_OK")
</pallas_src>

<mosaic_0001>
module attributes {stable_mosaic.version = 11 : i64} {
  func.func @gru_cell_kernel(%arg0: i32, %arg1: memref<8x128xf32, #tpu.memory_space<vmem>>, %arg2: memref<8x128xf32, #tpu.memory_space<vmem>>, %arg3: memref<128x384xf32, #tpu.memory_space<vmem>>, %arg4: memref<128x256xf32, #tpu.memory_space<vmem>>, %arg5: memref<128x128xf32, #tpu.memory_space<vmem>>, %arg6: memref<8x128xf32, #tpu.memory_space<vmem>>) attributes {dimension_semantics = [#tpu.dimension_semantics<parallel>], iteration_bounds = array<i64: 1>, scalar_prefetch = 0 : i64, scratch_operands = 0 : i64, tpu.core_type = #tpu.core_type<tc>, window_params = [{transform_indices = @transform_0, window_bounds = array<i64: 8, 128>}, {transform_indices = @transform_1, window_bounds = array<i64: 8, 128>}, {pipeline_mode = #tpu.pipeline_mode<synchronous>, transform_indices = @transform_2, window_bounds = array<i64: 128, 384>}, {pipeline_mode = #tpu.pipeline_mode<synchronous>, transform_indices = @transform_3, window_bounds = array<i64: 128, 256>}, {pipeline_mode = #tpu.pipeline_mode<synchronous>, transform_indices = @transform_4, window_bounds = array<i64: 128, 128>}, {transform_indices = @transform_5, window_bounds = array<i64: 8, 128>}]} {
    %c0 = arith.constant 0 : index
    %c0_0 = arith.constant 0 : index
    %0 = vector.load %arg1[%c0, %c0_0] : memref<8x128xf32, #tpu.memory_space<vmem>>, vector<8x128xf32>
    %c0_1 = arith.constant 0 : index
    %c0_2 = arith.constant 0 : index
    %1 = vector.load %arg2[%c0_1, %c0_2] : memref<8x128xf32, #tpu.memory_space<vmem>>, vector<8x128xf32>
    %c0_3 = arith.constant 0 : index
    %c0_4 = arith.constant 0 : index
    %2 = vector.load %arg3[%c0_3, %c0_4] : memref<128x384xf32, #tpu.memory_space<vmem>>, vector<128x384xf32>
    %c0_5 = arith.constant 0 : index
    %c0_6 = arith.constant 0 : index
    %3 = vector.load %arg4[%c0_5, %c0_6] : memref<128x256xf32, #tpu.memory_space<vmem>>, vector<128x256xf32>
    %c0_7 = arith.constant 0 : index
    %c0_8 = arith.constant 0 : index
    %4 = vector.load %arg5[%c0_7, %c0_8] : memref<128x128xf32, #tpu.memory_space<vmem>>, vector<128x128xf32>
    %cst = arith.constant dense<0.000000e+00> : vector<8x384xf32>
    %5 = tpu.matmul %0, %2, %cst {dimension_numbers = #tpu.dot_dimension_numbers<[1], [0], [0], [1], [0, 0, 1, 1], [], []>} : vector<8x128xf32>, vector<128x384xf32>, vector<8x384xf32> -> vector<8x384xf32>
    %cst_9 = arith.constant dense<0.000000e+00> : vector<8x256xf32>
    %6 = tpu.matmul %1, %3, %cst_9 {dimension_numbers = #tpu.dot_dimension_numbers<[1], [0], [0], [1], [0, 0, 1, 1], [], []>} : vector<8x128xf32>, vector<128x256xf32>, vector<8x256xf32> -> vector<8x256xf32>
    %7 = vector.extract_strided_slice %5 {offsets = [0, 0], sizes = [8, 128], strides = [1, 1]} : vector<8x384xf32> to vector<8x128xf32>
    %8 = vector.extract_strided_slice %6 {offsets = [0, 0], sizes = [8, 128], strides = [1, 1]} : vector<8x256xf32> to vector<8x128xf32>
    %9 = arith.addf %7, %8 : vector<8x128xf32>
    %10 = arith.negf %9 : vector<8x128xf32>
    %11 = math.exp %10 : vector<8x128xf32>
    %cst_10 = arith.constant 1.000000e+00 : f32
    %12 = vector.broadcast %cst_10 : f32 to vector<8x128xf32>
    %13 = arith.addf %12, %11 : vector<8x128xf32>
    %14 = arith.divf %12, %13 : vector<8x128xf32>
    %15 = arith.mulf %14, %1 : vector<8x128xf32>
    %16 = vector.extract_strided_slice %5 {offsets = [0, 256], sizes = [8, 128], strides = [1, 1]} : vector<8x384xf32> to vector<8x128xf32>
    %cst_11 = arith.constant dense<0.000000e+00> : vector<8x128xf32>
    %17 = tpu.matmul %15, %4, %cst_11 {dimension_numbers = #tpu.dot_dimension_numbers<[1], [0], [0], [1], [0, 0, 1, 1], [], []>} : vector<8x128xf32>, vector<128x128xf32>, vector<8x128xf32> -> vector<8x128xf32>
    %18 = arith.addf %16, %17 : vector<8x128xf32>
    %19 = math.tanh %18 : vector<8x128xf32>
    %20 = vector.extract_strided_slice %5 {offsets = [0, 128], sizes = [8, 128], strides = [1, 1]} : vector<8x384xf32> to vector<8x128xf32>
    %21 = vector.extract_strided_slice %6 {offsets = [0, 128], sizes = [8, 128], strides = [1, 1]} : vector<8x256xf32> to vector<8x128xf32>
    %22 = arith.addf %20, %21 : vector<8x128xf32>
    %23 = arith.negf %22 : vector<8x128xf32>
    %24 = math.exp %23 : vector<8x128xf32>
    %cst_12 = arith.constant 1.000000e+00 : f32
    %25 = vector.broadcast %cst_12 : f32 to vector<8x128xf32>
    %26 = arith.addf %25, %24 : vector<8x128xf32>
    %27 = arith.divf %25, %26 : vector<8x128xf32>
    %28 = arith.subf %19, %1 : vector<8x128xf32>
    %29 = arith.mulf %27, %28 : vector<8x128xf32>
    %30 = arith.addf %1, %29 : vector<8x128xf32>
    %c0_13 = arith.constant 0 : index
    %c0_14 = arith.constant 0 : index
    %31 = vector.load %arg6[%c0_13, %c0_14] : memref<8x128xf32, #tpu.memory_space<vmem>>, vector<8x128xf32>
    tpu.vector_store %arg6[%c0_13, %c0_14], %30 {strides = array<i32>} : memref<8x128xf32, #tpu.memory_space<vmem>>, vector<8x128xf32>,
    return
  }
  func.func @transform_0(%arg0: i32) -> (i32, i32) {
    %c0_i32 = arith.constant 0 : i32
    %c0_i32_0 = arith.constant 0 : i32
    return %arg0, %c0_i32 : i32, i32
  }
  func.func @transform_1(%arg0: i32) -> (i32, i32) {
    %c0_i32 = arith.constant 0 : i32
    %c0_i32_0 = arith.constant 0 : i32
    return %arg0, %c0_i32 : i32, i32
  }
  func.func @transform_2(%arg0: i32) -> (i32, i32) {
    %c0_i32 = arith.constant 0 : i32
    %c0_i32_0 = arith.constant 0 : i32
    %c0_i32_1 = arith.constant 0 : i32
    return %c0_i32, %c0_i32_0 : i32, i32
  }
  func.func @transform_3(%arg0: i32) -> (i32, i32) {
    %c0_i32 = arith.constant 0 : i32
    %c0_i32_0 = arith.constant 0 : i32
    %c0_i32_1 = arith.constant 0 : i32
    return %c0_i32, %c0_i32_0 : i32, i32
  }
  func.func @transform_4(%arg0: i32) -> (i32, i32) {
    %c0_i32 = arith.constant 0 : i32
    %c0_i32_0 = arith.constant 0 : i32
    %c0_i32_1 = arith.constant 0 : i32
    return %c0_i32, %c0_i32_0 : i32, i32
  }
  func.func @transform_5(%arg0: i32) -> (i32, i32) {
    %c0_i32 = arith.constant 0 : i32
    %c0_i32_0 = arith.constant 0 : i32
    return %arg0, %c0_i32 : i32, i32
  }
}

</mosaic_0001>

<llo_original>
// kernel: _gru_cell_call.1
$region0: #{_gru_cell_call.1}
  #allocation0 [shape = 'u32[]', space=smem, size = 0x4, offset = 0x4, fixed_abs, tag = 'smem constant byte address 0x4 - core index']
  #allocation1 [shape = 'u32[144,128]{1,0:T(1,128)}', space=vmem, size = 0x12000, scoped, tag = 'internal scratch']
  %s0 = inlined_call_operand.vmem [shape: f32[8,128], index: 0, kind: input, shape index: {}]
  %s1 = inlined_call_operand.vmem [shape: f32[8,128], index: 1, kind: input, shape index: {}]
  %s2 = inlined_call_operand.hbm [shape: f32[128,384], index: 2, kind: input, shape index: {}]
  %s3 = inlined_call_operand.hbm [shape: f32[128,256], index: 3, kind: input, shape index: {}]
  %s4 = inlined_call_operand.hbm [shape: f32[128,128], index: 4, kind: input, shape index: {}]
  %s5 = inlined_call_operand.hbm [shape: f32[8,128], index: 5, kind: output, shape index: {}]
  %s6 = sld [smem:[#allocation0]]
  $region42: #{_gru_cell_call.1} parent=0
    _
  %s8 = ssub.s32 1, %s6
  %s9 = scalar_select 0, %s8, %s6
  $region1: #{_gru_cell_call.1} parent=0
    #allocation2 [shape = 'u8[196608]{0}', space=vmem, size = 0x30000, scoped, tag = 'input window, operand 2, single buffered']
    #allocation3 [shape = 's32[1]{0}', space=sflag, size = 0x4, scoped, tag = 'scoped memory for _gru_cell_call.1']
    #allocation4 [shape = 's32[1]{0}', space=sflag, size = 0x4, scoped, tag = 'scoped memory for _gru_cell_call.1']
    #allocation5 [shape = 'u8[131072]{0}', space=vmem, size = 0x20000, scoped, tag = 'input window, operand 3, single buffered']
    #allocation6 [shape = 's32[1]{0}', space=sflag, size = 0x4, scoped, tag = 'scoped memory for _gru_cell_call.1']
    #allocation7 [shape = 'u8[65536]{0}', space=vmem, size = 0x10000, scoped, tag = 'input window, operand 4, single buffered']
    #allocation8 [shape = 'u8[4096]{0}', space=vmem, size = 0x1000, scoped, tag = 'output window, operand 0, single buffered']
    %10 = vsyncpa [#allocation3], 0
    %11 = vsyncpa [#allocation6], 0
    %12 = vsyncpa [#allocation4], 0
    // Predicated region
    $region2: #{_gru_cell_call.1} parent=1 // pred_check
      _
    $region3: #{_gru_cell_call.1} parent=1 // pred_check_branch
      %14 = sbr.rel (0) target = $region5
    $region4: #{_gru_cell_call.1} parent=1 // pred_region
      _
    $region5: #{_gru_cell_call.1} parent=1 // pred_fallthru
      _
    // Predicated region
    $region6: #{_gru_cell_call.1} parent=1 // pred_check
      _
    $region7: #{_gru_cell_call.1} parent=1 // pred_check_branch
      %16 = sbr.rel (0) target = $region9
    $region8: #{_gru_cell_call.1} parent=1 // pred_region
      _
    $region9: #{_gru_cell_call.1} parent=1 // pred_fallthru
      _
    // Predicated region
    $region10: #{_gru_cell_call.1} parent=1 // pred_check
      _
    $region11: #{_gru_cell_call.1} parent=1 // pred_check_branch
      %18 = sbr.rel (0) target = $region13
    $region12: #{_gru_cell_call.1} parent=1 // pred_region
      %s20 = ssub.s32 6144, 6144
      %21 = vsyncadd [#allocation3], %s20
      %s22 = sshll.u32 [#allocation2], 4
      %s23 = int_to_ptr.vmem [resolvable:$true] %s22
      %28 = dma.hbm_to_vmem [thread:$0]  %s2, 6144, %s23, [#allocation3], 384, 384, 24
    $region13: #{_gru_cell_call.1} parent=1 // pred_fallthru
      _
    // Predicated region
    $region14: #{_gru_cell_call.1} parent=1 // pred_check
      _
    $region15: #{_gru_cell_call.1} parent=1 // pred_check_branch
      %30 = sbr.rel (0) target = $region17
    $region16: #{_gru_cell_call.1} parent=1 // pred_region
      %s32 = ssub.s32 4096, 4096
      %33 = vsyncadd [#allocation6], %s32
      %s34 = sshll.u32 [#allocation5], 4
      %s35 = int_to_ptr.vmem [resolvable:$true] %s34
      %40 = dma.hbm_to_vmem [thread:$0]  %s3, 4096, %s35, [#allocation6], 256, 256, 16
    $region17: #{_gru_cell_call.1} parent=1 // pred_fallthru
      _
    // Predicated region
    $region18: #{_gru_cell_call.1} parent=1 // pred_check
      _
    $region19: #{_gru_cell_call.1} parent=1 // pred_check_branch
      %42 = sbr.rel (0) target = $region21
    $region20: #{_gru_cell_call.1} parent=1 // pred_region
      %s44 = ssub.s32 2048, 2048
      %45 = vsyncadd [#allocation6], %s44
      %s46 = sshll.u32 [#allocation7], 4
      %s47 = int_to_ptr.vmem [resolvable:$true] %s46
      %52 = dma.hbm_to_vmem [thread:$0]  %s4, 2048, %s47, [#allocation6], 128, 128, 8
    $region21: #{_gru_cell_call.1} parent=1 // pred_fallthru
      _
    // Predicated region
    $region22: #{_gru_cell_call.1} parent=1 // pred_check
      _
    $region23: #{_gru_cell_call.1} parent=1 // pred_check_branch
      %54 = sbr.rel (0) target = $region25
    $region24: #{_gru_cell_call.1} parent=1 // pred_region
      %55 = dma.done [#allocation3], 6144
    $region25: #{_gru_cell_call.1} parent=1 // pred_fallthru
      _
    // Predicated region
    $region26: #{_gru_cell_call.1} parent=1 // pred_check
      _
    $region27: #{_gru_cell_call.1} parent=1 // pred_check_branch
      %57 = sbr.rel (0) target = $region29
    $region28: #{_gru_cell_call.1} parent=1 // pred_region
      %58 = dma.done [#allocation6], 4096
    $region29: #{_gru_cell_call.1} parent=1 // pred_fallthru
      _
    // Predicated region
    $region30: #{_gru_cell_call.1} parent=1 // pred_check
      _
    $region31: #{_gru_cell_call.1} parent=1 // pred_check_branch
      %60 = sbr.rel (0) target = $region33
    $region32: #{_gru_cell_call.1} parent=1 // pred_region
      %61 = dma.done [#allocation6], 2048
    $region33: #{_gru_cell_call.1} parent=1 // pred_fallthru
      _
    %v62 = vld [vmem:[%s0] sm:$0xff]
    %v63 = vld [vmem:[%s1] sm:$0xff]
    %v64 = vld [vmem:[#allocation2] sm:$0xff]
    %v65 = vld [vmem:[#allocation2 + $0x8] sm:$0xff]
    %v66 = vld [vmem:[#allocation2 + $0x10] sm:$0xff]
    %v67 = vld [vmem:[#allocation2 + $0x18] sm:$0xff]
    %v68 = vld [vmem:[#allocation2 + $0x20] sm:$0xff]
    %v69 = vld [vmem:[#allocation2 + $0x28] sm:$0xff]
    %v70 = vld [vmem:[#allocation2 + $0x30] sm:$0xff]
    %v71 = vld [vmem:[#allocation2 + $0x38] sm:$0xff]
    %v72 = vld [vmem:[#allocation2 + $0x40] sm:$0xff]
    %v73 = vld [vmem:[#allocation2 + $0x48] sm:$0xff]
    %v74 = vld [vmem:[#allocation2 + $0x50] sm:$0xff]
    %v75 = vld [vmem:[#allocation2 + $0x58] sm:$0xff]
    %v76 = vld [vmem:[#allocation2 + $0x60] sm:$0xff]
    %v77 = vld [vmem:[#allocation2 + $0x68] sm:$0xff]
    %v78 = vld [vmem:[#allocation2 + $0x70] sm:$0xff]
    %v79 = vld [vmem:[#allocation2 + $0x78] sm:$0xff]
    %v80 = vld [vmem:[#allocation2 + $0x80] sm:$0xff]
    %v81 = vld [vmem:[#allocation2 + $0x88] sm:$0xff]
    %v82 = vld [vmem:[#allocation2 + $0x90] sm:$0xff]
    %v83 = vld [vmem:[#allocation2 + $0x98] sm:$0xff]
    %v84 = vld [vmem:[#allocation2 + $0xa0] sm:$0xff]
    %v85 = vld [vmem:[#allocation2 + $0xa8] sm:$0xff]
    %v86 = vld [vmem:[#allocation2 + $0xb0] sm:$0xff]
    %v87 = vld [vmem:[#allocation2 + $0xb8] sm:$0xff]
    %v88 = vld [vmem:[#allocation2 + $0xc0] sm:$0xff]
    %v89 = vld [vmem:[#allocation2 + $0xc8] sm:$0xff]
    %v90 = vld [vmem:[#allocation2 + $0xd0] sm:$0xff]
    %v91 = vld [vmem:[#allocation2 + $0xd8] sm:$0xff]
    %v92 = vld [vmem:[#allocation2 + $0xe0] sm:$0xff]
    %v93 = vld [vmem:[#allocation2 + $0xe8] sm:$0xff]
    %v94 = vld [vmem:[#allocation2 + $0xf0] sm:$0xff]
    %v95 = vld [vmem:[#allocation2 + $0xf8] sm:$0xff]
    %v96 = vld [vmem:[#allocation2 + $0x100] sm:$0xff]
    %v97 = vld [vmem:[#allocation2 + $0x108] sm:$0xff]
    %v98 = vld [vmem:[#allocation2 + $0x110] sm:$0xff]
    %v99 = vld [vmem:[#allocation2 + $0x118] sm:$0xff]
    %v100 = vld [vmem:[#allocation2 + $0x120] sm:$0xff]
    %v101 = vld [vmem:[#allocation2 + $0x128] sm:$0xff]
    %v102 = vld [vmem:[#allocation2 + $0x130] sm:$0xff]
    %v103 = vld [vmem:[#allocation2 + $0x138] sm:$0xff]
    %v104 = vld [vmem:[#allocation2 + $0x140] sm:$0xff]
    %v105 = vld [vmem:[#allocation2 + $0x148] sm:$0xff]
    %v106 = vld [vmem:[#allocation2 + $0x150] sm:$0xff]
    %v107 = vld [vmem:[#allocation2 + $0x158] sm:$0xff]
    %v108 = vld [vmem:[#allocation2 + $0x160] sm:$0xff]
    %v109 = vld [vmem:[#allocation2 + $0x168] sm:$0xff]
    %v110 = vld [vmem:[#allocation2 + $0x170] sm:$0xff]
    %v111 = vld [vmem:[#allocation2 + $0x178] sm:$0xff]
    %v112 = vld [vmem:[#allocation5] sm:$0xff]
    %v113 = vld [vmem:[#allocation5 + $0x8] sm:$0xff]
    %v114 = vld [vmem:[#allocation5 + $0x10] sm:$0xff]
    %v115 = vld [vmem:[#allocation5 + $0x18] sm:$0xff]
    %v116 = vld [vmem:[#allocation5 + $0x20] sm:$0xff]
    %v117 = vld [vmem:[#allocation5 + $0x28] sm:$0xff]
    %v118 = vld [vmem:[#allocation5 + $0x30] sm:$0xff]
    %v119 = vld [vmem:[#allocation5 + $0x38] sm:$0xff]
    %v120 = vld [vmem:[#allocation5 + $0x40] sm:$0xff]
    %v121 = vld [vmem:[#allocation5 + $0x48] sm:$0xff]
    %v122 = vld [vmem:[#allocation5 + $0x50] sm:$0xff]
    %v123 = vld [vmem:[#allocation5 + $0x58] sm:$0xff]
    %v124 = vld [vmem:[#allocation5 + $0x60] sm:$0xff]
    %v125 = vld [vmem:[#allocation5 + $0x68] sm:$0xff]
    %v126 = vld [vmem:[#allocation5 + $0x70] sm:$0xff]
    %v127 = vld [vmem:[#allocation5 + $0x78] sm:$0xff]
    %v128 = vld [vmem:[#allocation5 + $0x80] sm:$0xff]
    %v129 = vld [vmem:[#allocation5 + $0x88] sm:$0xff]
    %v130 = vld [vmem:[#allocation5 + $0x90] sm:$0xff]
    %v131 = vld [vmem:[#allocation5 + $0x98] sm:$0xff]
    %v132 = vld [vmem:[#allocation5 + $0xa0] sm:$0xff]
    %v133 = vld [vmem:[#allocation5 + $0xa8] sm:$0xff]
    %v134 = vld [vmem:[#allocation5 + $0xb0] sm:$0xff]
    %v135 = vld [vmem:[#allocation5 + $0xb8] sm:$0xff]
    %v136 = vld [vmem:[#allocation5 + $0xc0] sm:$0xff]
    %v137 = vld [vmem:[#allocation5 + $0xc8] sm:$0xff]
    %v138 = vld [vmem:[#allocation5 + $0xd0] sm:$0xff]
    %v139 = vld [vmem:[#allocation5 + $0xd8] sm:$0xff]
    %v140 = vld [vmem:[#allocation5 + $0xe0] sm:$0xff]
    %v141 = vld [vmem:[#allocation5 + $0xe8] sm:$0xff]
    %v142 = vld [vmem:[#allocation5 + $0xf0] sm:$0xff]
    %v143 = vld [vmem:[#allocation5 + $0xf8] sm:$0xff]
    %v144 = vld [vmem:[#allocation7] sm:$0xff]
    %v145 = vld [vmem:[#allocation7 + $0x8] sm:$0xff]
    %v146 = vld [vmem:[#allocation7 + $0x10] sm:$0xff]
    %v147 = vld [vmem:[#allocation7 + $0x18] sm:$0xff]
    %v148 = vld [vmem:[#allocation7 + $0x20] sm:$0xff]
    %v149 = vld [vmem:[#allocation7 + $0x28] sm:$0xff]
    %v150 = vld [vmem:[#allocation7 + $0x30] sm:$0xff]
    %v151 = vld [vmem:[#allocation7 + $0x38] sm:$0xff]
    %v152 = vld [vmem:[#allocation7 + $0x40] sm:$0xff]
    %v153 = vld [vmem:[#allocation7 + $0x48] sm:$0xff]
    %v154 = vld [vmem:[#allocation7 + $0x50] sm:$0xff]
    %v155 = vld [vmem:[#allocation7 + $0x58] sm:$0xff]
    %v156 = vld [vmem:[#allocation7 + $0x60] sm:$0xff]
    %v157 = vld [vmem:[#allocation7 + $0x68] sm:$0xff]
    %v158 = vld [vmem:[#allocation7 + $0x70] sm:$0xff]
    %v159 = vld [vmem:[#allocation7 + $0x78] sm:$0xff]
    %160 = vmatprep.subr.mxu0 %v110
    %161 = vmatpush1.msra.mxu0 %v109
    %162 = vmatprep.subr.mxu0 %v107
    %163 = vmatpush1.msra.mxu0 %v106
    %164 = vmatprep.subr.mxu0 %v104
    %165 = vmatpush1.msra.mxu0 %v103
    %166 = vmatprep.subr.mxu0 %v101
    %167 = vmatpush1.msra.mxu0 %v100
    %168 = vmatprep.subr.mxu0 %v98
    %169 = vmatpush1.msra.mxu0 %v97
    %170 = vmatprep.subr.mxu0 %v95
    %171 = vmatpush1.msra.mxu0 %v94
    %172 = vmatprep.subr.mxu0 %v92
    %173 = vmatpush1.msra.mxu0 %v91
    %174 = vmatprep.subr.mxu0 %v89
    %175 = vmatpush1.msra.mxu0 %v88
    %176 = vmatprep.subr.mxu0 %v86
    %177 = vmatpush1.msra.mxu0 %v85
    %178 = vmatprep.subr.mxu0 %v83
    %179 = vmatpush1.msra.mxu0 %v82
    %180 = vmatprep.subr.mxu0 %v80
    %181 = vmatpush1.msra.mxu0 %v79
    %182 = vmatprep.subr.mxu0 %v77
    %183 = vmatpush1.msra.mxu0 %v76
    %184 = vmatprep.subr.mxu0 %v74
    %185 = vmatpush1.msra.mxu0 %v73
    %186 = vmatprep.subr.mxu0 %v71
    %187 = vmatpush1.msra.mxu0 %v70
    %188 = vmatprep.subr.mxu0 %v68
    %189 = vmatpush1.msra.mxu0 %v67
    %190 = vmatprep.subr.mxu0 %v65
    %191 = vmatpush1.msra.mxu0 %v64
    %192 = vmatprep.subr.mxu0 0.0
    %193 = vmatpush2.msra.mxu0 0.0
    %194 = vmatprep.subr.mxu0 0.0
    %195 = vmatpush2.msra.mxu0 0.0
    %196 = vmatprep.subr.mxu0 0.0
    %197 = vmatpush2.msra.mxu0 0.0
    %198 = vmatprep.subr.mxu0 0.0
    %199 = vmatpush2.msra.mxu0 0.0
    %200 = vmatprep.subr.mxu0 0.0
    %201 = vmatpush2.msra.mxu0 0.0
    %202 = vmatprep.subr.mxu0 0.0
    %203 = vmatpush2.msra.mxu0 0.0
    %204 = vmatprep.subr.mxu0 0.0
    %205 = vmatpush2.msra.mxu0 0.0
    %206 = vmatprep.subr.mxu0 0.0
    %207 = vmatpush2.msra.mxu0 0.0
    %208 = vmatprep.subr.mxu0 0.0
    %209 = vmatpush2.msra.mxu0 0.0
    %210 = vmatprep.subr.mxu0 0.0
    %211 = vmatpush2.msra.mxu0 0.0
    %212 = vmatprep.subr.mxu0 0.0
    %213 = vmatpush2.msra.mxu0 0.0
    %214 = vmatprep.subr.mxu0 0.0
    %215 = vmatpush2.msra.mxu0 0.0
    %216 = vmatprep.subr.mxu0 0.0
    %217 = vmatpush2.msra.mxu0 0.0
    %218 = vmatprep.subr.mxu0 0.0
    %219 = vmatpush2.msra.mxu0 0.0
    %220 = vmatprep.subr.mxu0 0.0
    %221 = vmatpush2.msra.mxu0 0.0
    %222 = vmatprep.subr.mxu0 0.0
    %223 = vmatpush2.msra.mxu0 0.0
    %224 = vmatprep.mubr.f32.mxu0 0.0
    %225 = vmatmul.mubr.f32.gmra.mxu0 %v62
    %v226 = vpop.f32.mrf.mxu0
    %v227 = vadd.f32 0.0, %v226
    %v228 = vpop.f32.mrf.mxu0
    %v229 = vadd.f32 0.0, %v228
    %230 = vdwg.mxu0
    %231 = vmatprep.subr.mxu0 0.0
    %232 = vmatpush1.msra.mxu0 %v111
    %233 = vmatprep.subr.mxu0 0.0
    %234 = vmatpush1.msra.mxu0 %v108
    %235 = vmatprep.subr.mxu0 0.0
    %236 = vmatpush1.msra.mxu0 %v105
    %237 = vmatprep.subr.mxu0 0.0
    %238 = vmatpush1.msra.mxu0 %v102
    %239 = vmatprep.subr.mxu0 0.0
    %240 = vmatpush1.msra.mxu0 %v99
    %241 = vmatprep.subr.mxu0 0.0
    %242 = vmatpush1.msra.mxu0 %v96
    %243 = vmatprep.subr.mxu0 0.0
    %244 = vmatpush1.msra.mxu0 %v93
    %245 = vmatprep.subr.mxu0 0.0
    %246 = vmatpush1.msra.mxu0 %v90
    %247 = vmatprep.subr.mxu0 0.0
    %248 = vmatpush1.msra.mxu0 %v87
    %249 = vmatprep.subr.mxu0 0.0
    %250 = vmatpush1.msra.mxu0 %v84
    %251 = vmatprep.subr.mxu0 0.0
    %252 = vmatpush1.msra.mxu0 %v81
    %253 = vmatprep.subr.mxu0 0.0
    %254 = vmatpush1.msra.mxu0 %v78
    %255 = vmatprep.subr.mxu0 0.0
    %256 = vmatpush1.msra.mxu0 %v75
    %257 = vmatprep.subr.mxu0 0.0
    %258 = vmatpush1.msra.mxu0 %v72
    %259 = vmatprep.subr.mxu0 0.0
    %260 = vmatpush1.msra.mxu0 %v69
    %261 = vmatprep.subr.mxu0 0.0
    %262 = vmatpush1.msra.mxu0 %v66
    %263 = vmatprep.subr.mxu0 0.0
    %264 = vmatpush2.msra.mxu0 0.0
    %265 = vmatprep.subr.mxu0 0.0
    %266 = vmatpush2.msra.mxu0 0.0
    %267 = vmatprep.subr.mxu0 0.0
    %268 = vmatpush2.msra.mxu0 0.0
    %269 = vmatprep.subr.mxu0 0.0
    %270 = vmatpush2.msra.mxu0 0.0
    %271 = vmatprep.subr.mxu0 0.0
    %272 = vmatpush2.msra.mxu0 0.0
    %273 = vmatprep.subr.mxu0 0.0
    %274 = vmatpush2.msra.mxu0 0.0
    %275 = vmatprep.subr.mxu0 0.0
    %276 = vmatpush2.msra.mxu0 0.0
    %277 = vmatprep.subr.mxu0 0.0
    %278 = vmatpush2.msra.mxu0 0.0
    %279 = vmatprep.subr.mxu0 0.0
    %280 = vmatpush2.msra.mxu0 0.0
    %281 = vmatprep.subr.mxu0 0.0
    %282 = vmatpush2.msra.mxu0 0.0
    %283 = vmatprep.subr.mxu0 0.0
    %284 = vmatpush2.msra.mxu0 0.0
    %285 = vmatprep.subr.mxu0 0.0
    %286 = vmatpush2.msra.mxu0 0.0
    %287 = vmatprep.subr.mxu0 0.0
    %288 = vmatpush2.msra.mxu0 0.0
    %289 = vmatprep.subr.mxu0 0.0
    %290 = vmatpush2.msra.mxu0 0.0
    %291 = vmatprep.subr.mxu0 0.0
    %292 = vmatpush2.msra.mxu0 0.0
    %293 = vmatprep.subr.mxu0 0.0
    %294 = vmatpush2.msra.mxu0 0.0
    %295 = vmatprep.mubr.f32.mxu0 0.0
    %296 = vmatmul.mubr.f32.gmra.mxu0 %v62
    %v297 = vpop.f32.mrf.mxu0
    %v298 = vadd.f32 0.0, %v297
    %v299 = vpop.f32.mrf.mxu0
    %300 = vdwg.mxu0
    %301 = vmatprep.subr.mxu0 %v143
    %302 = vmatpush1.msra.mxu0 %v142
    %303 = vmatprep.subr.mxu0 %v141
    %304 = vmatpush1.msra.mxu0 %v140
    %305 = vmatprep.subr.mxu0 %v139
    %306 = vmatpush1.msra.mxu0 %v138
    %307 = vmatprep.subr.mxu0 %v137
    %308 = vmatpush1.msra.mxu0 %v136
    %309 = vmatprep.subr.mxu0 %v135
    %310 = vmatpush1.msra.mxu0 %v134
    %311 = vmatprep.subr.mxu0 %v133
    %312 = vmatpush1.msra.mxu0 %v132
    %313 = vmatprep.subr.mxu0 %v131
    %314 = vmatpush1.msra.mxu0 %v130
    %315 = vmatprep.subr.mxu0 %v129
    %316 = vmatpush1.msra.mxu0 %v128
    %317 = vmatprep.subr.mxu0 %v127
    %318 = vmatpush1.msra.mxu0 %v126
    %319 = vmatprep.subr.mxu0 %v125
    %320 = vmatpush1.msra.mxu0 %v124
    %321 = vmatprep.subr.mxu0 %v123
    %322 = vmatpush1.msra.mxu0 %v122
    %323 = vmatprep.subr.mxu0 %v121
    %324 = vmatpush1.msra.mxu0 %v120
    %325 = vmatprep.subr.mxu0 %v119
    %326 = vmatpush1.msra.mxu0 %v118
    %327 = vmatprep.subr.mxu0 %v117
    %328 = vmatpush1.msra.mxu0 %v116
    %329 = vmatprep.subr.mxu0 %v115
    %330 = vmatpush1.msra.mxu0 %v114
    %331 = vmatprep.subr.mxu0 %v113
    %332 = vmatpush1.msra.mxu0 %v112
    %333 = vmatprep.subr.mxu0 0.0
    %334 = vmatpush2.msra.mxu0 0.0
    %335 = vmatprep.subr.mxu0 0.0
    %336 = vmatpush2.msra.mxu0 0.0
    %337 = vmatprep.subr.mxu0 0.0
    %338 = vmatpush2.msra.mxu0 0.0
    %339 = vmatprep.subr.mxu0 0.0
    %340 = vmatpush2.msra.mxu0 0.0
    %341 = vmatprep.subr.mxu0 0.0
    %342 = vmatpush2.msra.mxu0 0.0
    %343 = vmatprep.subr.mxu0 0.0
    %344 = vmatpush2.msra.mxu0 0.0
    %345 = vmatprep.subr.mxu0 0.0
    %346 = vmatpush2.msra.mxu0 0.0
    %347 = vmatprep.subr.mxu0 0.0
    %348 = vmatpush2.msra.mxu0 0.0
    %349 = vmatprep.subr.mxu0 0.0
    %350 = vmatpush2.msra.mxu0 0.0
    %351 = vmatprep.subr.mxu0 0.0
    %352 = vmatpush2.msra.mxu0 0.0
    %353 = vmatprep.subr.mxu0 0.0
    %354 = vmatpush2.msra.mxu0 0.0
    %355 = vmatprep.subr.mxu0 0.0
    %356 = vmatpush2.msra.mxu0 0.0
    %357 = vmatprep.subr.mxu0 0.0
    %358 = vmatpush2.msra.mxu0 0.0
    %359 = vmatprep.subr.mxu0 0.0
    %360 = vmatpush2.msra.mxu0 0.0
    %361 = vmatprep.subr.mxu0 0.0
    %362 = vmatpush2.msra.mxu0 0.0
    %363 = vmatprep.subr.mxu0 0.0
    %364 = vmatpush2.msra.mxu0 0.0
    %365 = vmatprep.mubr.f32.mxu0 0.0
    %366 = vmatmul.mubr.f32.gmra.mxu0 %v63
    %v367 = vpop.f32.mrf.mxu0
    %v368 = vadd.f32 0.0, %v367
    %v369 = vpop.f32.mrf.mxu0
    %v370 = vadd.f32 0.0, %v369
    %371 = vdwg.mxu0
    %v372 = vadd.f32 %v227, %v368
    %v373 = vxor.u32 %v372, 2147483648
    %v374 = vmul.f32 %v373, 1.442695
    %v375 = vpow.pop %v374
    %v376 = vadd.f32 %v375, 1.0
    %v377 = vrcp.pop %v376
    %v378 = vmul.f32 1.0, %v377
    %v379 = vmul.f32 %v378, %v63
    %380 = vmatprep.subr.mxu0 0.0
    %381 = vmatpush1.msra.mxu0 %v159
    %382 = vmatprep.subr.mxu0 0.0
    %383 = vmatpush1.msra.mxu0 %v158
    %384 = vmatprep.subr.mxu0 0.0
    %385 = vmatpush1.msra.mxu0 %v157
    %386 = vmatprep.subr.mxu0 0.0
    %387 = vmatpush1.msra.mxu0 %v156
    %388 = vmatprep.subr.mxu0 0.0
    %389 = vmatpush1.msra.mxu0 %v155
    %390 = vmatprep.subr.mxu0 0.0
    %391 = vmatpush1.msra.mxu0 %v154
    %392 = vmatprep.subr.mxu0 0.0
    %393 = vmatpush1.msra.mxu0 %v153
    %394 = vmatprep.subr.mxu0 0.0
    %395 = vmatpush1.msra.mxu0 %v152
    %396 = vmatprep.subr.mxu0 0.0
    %397 = vmatpush1.msra.mxu0 %v151
    %398 = vmatprep.subr.mxu0 0.0
    %399 = vmatpush1.msra.mxu0 %v150
    %400 = vmatprep.subr.mxu0 0.0
    %401 = vmatpush1.msra.mxu0 %v149
    %402 = vmatprep.subr.mxu0 0.0
    %403 = vmatpush1.msra.mxu0 %v148
    %404 = vmatprep.subr.mxu0 0.0
    %405 = vmatpush1.msra.mxu0 %v147
    %406 = vmatprep.subr.mxu0 0.0
    %407 = vmatpush1.msra.mxu0 %v146
    %408 = vmatprep.subr.mxu0 0.0
    %409 = vmatpush1.msra.mxu0 %v145
    %410 = vmatprep.subr.mxu0 0.0
    %411 = vmatpush1.msra.mxu0 %v144
    %412 = vmatprep.subr.mxu0 0.0
    %413 = vmatpush2.msra.mxu0 0.0
    %414 = vmatprep.subr.mxu0 0.0
    %415 = vmatpush2.msra.mxu0 0.0
    %416 = vmatprep.subr.mxu0 0.0
    %417 = vmatpush2.msra.mxu0 0.0
    %418 = vmatprep.subr.mxu0 0.0
    %419 = vmatpush2.msra.mxu0 0.0
    %420 = vmatprep.subr.mxu0 0.0
    %421 = vmatpush2.msra.mxu0 0.0
    %422 = vmatprep.subr.mxu0 0.0
    %423 = vmatpush2.msra.mxu0 0.0
    %424 = vmatprep.subr.mxu0 0.0
    %425 = vmatpush2.msra.mxu0 0.0
    %426 = vmatprep.subr.mxu0 0.0
    %427 = vmatpush2.msra.mxu0 0.0
    %428 = vmatprep.subr.mxu0 0.0
    %429 = vmatpush2.msra.mxu0 0.0
    %430 = vmatprep.subr.mxu0 0.0
    %431 = vmatpush2.msra.mxu0 0.0
    %432 = vmatprep.subr.mxu0 0.0
    %433 = vmatpush2.msra.mxu0 0.0
    %434 = vmatprep.subr.mxu0 0.0
    %435 = vmatpush2.msra.mxu0 0.0
    %436 = vmatprep.subr.mxu0 0.0
    %437 = vmatpush2.msra.mxu0 0.0
    %438 = vmatprep.subr.mxu0 0.0
    %439 = vmatpush2.msra.mxu0 0.0
    %440 = vmatprep.subr.mxu0 0.0
    %441 = vmatpush2.msra.mxu0 0.0
    %442 = vmatprep.subr.mxu0 0.0
    %443 = vmatpush2.msra.mxu0 0.0
    %444 = vmatprep.mubr.f32.mxu0 0.0
    %445 = vmatmul.mubr.f32.gmra.mxu0 %v379
    %v446 = vpop.f32.mrf.mxu0
    %v447 = vadd.f32 0.0, %v446
    %v448 = vpop.f32.mrf.mxu0
    %449 = vdwg.mxu0
    %v450 = vadd.f32 %v298, %v447
    %v451 = vtanh.pop %v450
    %v452 = vadd.f32 %v229, %v370
    %v453 = vxor.u32 %v452, 2147483648
    %v454 = vmul.f32 %v453, 1.442695
    %v455 = vpow.pop %v454
    %v456 = vadd.f32 %v455, 1.0
    %v457 = vrcp.pop %v456
    %v458 = vmul.f32 1.0, %v457
    %v459 = vsub.f32 %v451, %v63
    %v460 = vmul.f32 %v458, %v459
    %v461 = vadd.f32 %v63, %v460
    %462 = vst [vmem:[#allocation8] sm:$0xff] %v461
    // Predicated region
    $region34: #{_gru_cell_call.1} parent=1 // pred_check
      _
    $region35: #{_gru_cell_call.1} parent=1 // pred_check_branch
      %464 = sbr.rel (0) target = $region37
    $region36: #{_gru_cell_call.1} parent=1 // pred_region
      %s466 = ssub.s32 128, 128
      %467 = vsyncadd [#allocation4], %s466
      %s469 = sshll.u32 [#allocation8], 4
      %s470 = int_to_ptr.vmem [resolvable:$true] %s469
      %472 = dma.vmem_to_hbm [thread:$0]  %s470, 128, %s5, [#allocation4]
    $region37: #{_gru_cell_call.1} parent=1 // pred_fallthru
      _
    // Predicated region
    $region38: #{_gru_cell_call.1} parent=1 // pred_check
      _
    $region39: #{_gru_cell_call.1} parent=1 // pred_check_branch
      %474 = sbr.rel (0) target = $region41
    $region40: #{_gru_cell_call.1} parent=1 // pred_region
      %475 = dma.done [#allocation4], 128
    $region41: #{_gru_cell_call.1} parent=1 // pred_fallthru
      _
    %476 = vsyncpa [#allocation3], 1
    %477 = vsyncpa [#allocation6], 1
    %478 = vsyncpa [#allocation4], 1

</llo_original>
